<compile_context>
chip_gen: v6e
topology: v6e:2x2x1
jax: 0.10.0
libtpu: 0.0.40
codegen_flags: <defaults>
</compile_context>

<pallas_src>
import jax
import jax.numpy as jnp
from jax.experimental import pallas as pl
from jax.experimental.pallas import tpu as pltpu


def qnetwork_kernel(x_ref, w1_ref, b1_ref, w2_ref, b2_ref, w3_ref, b3_ref, out_ref):
    """Fused twin-Q MLP, feature-major: x (d_in, TB) -> out (2, TB)."""
    # Layer 1: (2H, d_in) @ (d_in, TB) -> (2H, TB)   (concat already folded in)
    h = jnp.dot(w1_ref[...], x_ref[...], preferred_element_type=jnp.float32) + b1_ref[...]
    h = jnp.maximum(h, 0.0)
    # Layer 2: block-diagonal keeps the two Q branches independent.
    h = jnp.dot(w2_ref[...], h, preferred_element_type=jnp.float32) + b2_ref[...]
    h = jnp.maximum(h, 0.0)
    # Layer 3: (2, 2H) @ (2H, TB) -> (2, TB); row 0 = q1, row 1 = q2.
    out_ref[...] = (jnp.dot(w3_ref[...], h, preferred_element_type=jnp.float32)
                    + b3_ref[...]).astype(out_ref.dtype)


def pack_qnetwork_params(params, num_inputs):
    """One-time host-side packing of the 6 linear layers into 3 fused (out, in) mats."""
    (w1, b1, w2, b2, w3, b3, w4, b4, w5, b5, w6, b6) = params  # (in, out) / (1, out)
    H = w1.shape[1]
    # Layer 1: [W1 | W4] along outputs, then transpose -> (2H, d_in).
    w1t = jnp.concatenate([w1, w4], axis=1).T                  # (2H, d_in)
    b1t = jnp.concatenate([b1, b4], axis=1).T                  # (2H, 1)
    # Layer 2: blockdiag(W2, W5)^T -> (2H, 2H).
    zH = jnp.zeros((H, H), w2.dtype)
    w2t = jnp.block([[w2, zH], [zH, w5]]).T                    # (2H, 2H)
    b2t = jnp.concatenate([b2, b5], axis=1).T                  # (2H, 1)
    # Layer 3: blockdiag(W3, W6)^T -> (2, 2H); biases -> (2, 1).
    z1 = jnp.zeros((H, 1), w3.dtype)
    w3t = jnp.block([[w3, z1], [z1, w6]]).T                    # (2, 2H)
    b3t = jnp.concatenate([b3, b6], axis=1).T                  # (2, 1)
    return (w1t, b1t, w2t, b2t, w3t, b3t)


def qnetwork_forward(state, action, packed, *, batch_tile=2048):
    """Twin-Q forward. state: (B, num_inputs), action: (B, num_actions)."""
    w1t, b1t, w2t, b2t, w3t, b3t = packed
    B = state.shape[0]
    d_in = state.shape[1] + action.shape[1]
    H2 = w1t.shape[0]  # = 2 * hidden_dim

    # Fold torch.cat + feature-major layout transpose into one XLA pass: (d_in, B).
    xt = jnp.concatenate([state, action], axis=1).T

    # Batch tile selection (no padding pass):
    #  * small B  -> single block (block == full array dims is always legal),
    #  * larger B -> multiple-of-128 tile (lane-dense blocks) sized so the grid has
    #    >= 2 steps (both v7x TensorCores get work), capped at batch_tile.
    if B < 256:
        TB = B
    else:
        half = ((B + 1) // 2 + 127) // 128 * 128   # round_up(ceil(B/2), 128)
        TB = min(batch_tile, half)
    n_steps = pl.cdiv(B, TB)   # any ragged final block is masked by Pallas

    flops = 2 * B * (d_in * H2 + H2 * H2 + H2 * 2)
    bytes_accessed = 4 * (B * (d_in + 2) + d_in * H2 + H2 * H2 + 2 * H2 + 3 * H2 + 2)

    # Weights/biases: full block, constant index_map -> fetched once, VMEM-resident.
    wspec = lambda arr: pl.BlockSpec(arr.shape, lambda i: (0, 0))

    out = pl.pallas_call(
        qnetwork_kernel,
        out_shape=jax.ShapeDtypeStruct((2, B), jnp.float32),
        grid=(n_steps,),
        in_specs=[pl.BlockSpec((d_in, TB), lambda i: (0, i)),
                  wspec(w1t), wspec(b1t),
                  wspec(w2t), wspec(b2t),
                  wspec(w3t), wspec(b3t)],
        out_specs=pl.BlockSpec((2, TB), lambda i: (0, i)),
        compiler_params=pltpu.CompilerParams(
            dimension_semantics=("parallel",)),
        cost_estimate=pl.CostEstimate(flops=flops, transcendentals=0,
                                      bytes_accessed=bytes_accessed),
    )(xt, w1t, b1t, w2t, b2t, w3t, b3t)

    q1 = out[0, :][:, None]   # (B, 1)
    q2 = out[1, :][:, None]   # (B, 1)
    return q1, q2


def xavier_uniform(key, fan_in, fan_out, gain=1.0):
    # Matches torch.nn.init.xavier_uniform_ (gain=1); stored as (in, out).
    limit = gain * jnp.sqrt(6.0 / (fan_in + fan_out))
    return jax.random.uniform(key, (fan_in, fan_out), jnp.float32, -limit, limit)


def init_qnetwork_params(key, num_inputs, num_actions, hidden_dim):
    d_in = num_inputs + num_actions
    ks = jax.random.split(key, 6)
    w1 = xavier_uniform(ks[0], d_in, hidden_dim)
    w2 = xavier_uniform(ks[1], hidden_dim, hidden_dim)
    w3 = xavier_uniform(ks[2], hidden_dim, 1)
    w4 = xavier_uniform(ks[3], d_in, hidden_dim)
    w5 = xavier_uniform(ks[4], hidden_dim, hidden_dim)
    w6 = xavier_uniform(ks[5], hidden_dim, 1)
    zeros = lambda n: jnp.zeros((1, n), jnp.float32)  # torch init: bias = constant 0
    return (w1, zeros(hidden_dim), w2, zeros(hidden_dim), w3, zeros(1),
            w4, zeros(hidden_dim), w5, zeros(hidden_dim), w6, zeros(1))


def reference_forward(state, action, params):
    """Pure-JAX port of the original (unfused) PyTorch forward."""
    (w1, b1, w2, b2, w3, b3, w4, b4, w5, b5, w6, b6) = params
    xu = jnp.concatenate([state, action], axis=-1)
    x1 = jnp.maximum(xu @ w1 + b1, 0.0)
    x1 = jnp.maximum(x1 @ w2 + b2, 0.0)
    x1 = x1 @ w3 + b3
    x2 = jnp.maximum(xu @ w4 + b4, 0.0)
    x2 = jnp.maximum(x2 @ w5 + b5, 0.0)
    x2 = x2 @ w6 + b6
    return x1, x2


if __name__ == "__main__":
    num_inputs, num_actions, hidden_dim = 8, 4, 32

    key = jax.random.PRNGKey(0)
    k_params, k_bias, k_data = jax.random.split(key, 3)

    params = init_qnetwork_params(k_params, num_inputs, num_actions, hidden_dim)
    # Use small non-zero biases for the numerical check so bias plumbing is exercised
    # (the module itself initializes biases to 0).
    params = list(params)
    for slot, bk in zip((1, 3, 5, 7, 9, 11), jax.random.split(k_bias, 6)):
        params[slot] = 0.05 * jax.random.normal(bk, params[slot].shape, jnp.float32)
    params = tuple(params)
    packed = pack_qnetwork_params(params, num_inputs)   # packed once, reused per call

    # batch=4   -> single-block path (block == full array dims)
    # batch=256 -> TB=128, 2 grid steps: exercises the pipelined / dual-core path
    for batch in (4, 256):
        k_data, ks, ka = jax.random.split(k_data, 3)
        state = jax.random.normal(ks, (batch, num_inputs), jnp.float32)
        action = jax.random.normal(ka, (batch, num_actions), jnp.float32)

        q1, q2 = qnetwork_forward(state, action, packed)
        jax.block_until_ready((q1, q2))

        r1, r2 = reference_forward(state, action, params)
        assert q1.shape == (batch, 1) and q2.shape == (batch, 1)
        assert jnp.allclose(q1, r1, atol=1e-4, rtol=1e-4), "Q1 mismatch"
        assert jnp.allclose(q2, r2, atol=1e-4, rtol=1e-4), "Q2 mismatch"

    print("KERNEL_OK")
</pallas_src>

<mosaic_0001>
module attributes {stable_mosaic.version = 11 : i64} {
  func.func @qnetwork_kernel(%arg0: i32, %arg1: memref<12x4xf32, #tpu.memory_space<vmem>>, %arg2: memref<64x12xf32, #tpu.memory_space<vmem>>, %arg3: memref<64x1xf32, #tpu.memory_space<vmem>>, %arg4: memref<64x64xf32, #tpu.memory_space<vmem>>, %arg5: memref<64x1xf32, #tpu.memory_space<vmem>>, %arg6: memref<2x64xf32, #tpu.memory_space<vmem>>, %arg7: memref<2x1xf32, #tpu.memory_space<vmem>>, %arg8: memref<2x4xf32, #tpu.memory_space<vmem>>) attributes {dimension_semantics = [#tpu.dimension_semantics<parallel>], iteration_bounds = array<i64: 1>, scalar_prefetch = 0 : i64, scratch_operands = 0 : i64, tpu.core_type = #tpu.core_type<tc>, window_params = [{transform_indices = @transform_0, window_bounds = array<i64: 12, 4>}, {pipeline_mode = #tpu.pipeline_mode<synchronous>, transform_indices = @transform_1, window_bounds = array<i64: 64, 12>}, {pipeline_mode = #tpu.pipeline_mode<synchronous>, transform_indices = @transform_2, window_bounds = array<i64: 64, 1>}, {pipeline_mode = #tpu.pipeline_mode<synchronous>, transform_indices = @transform_3, window_bounds = array<i64: 64, 64>}, {pipeline_mode = #tpu.pipeline_mode<synchronous>, transform_indices = @transform_4, window_bounds = array<i64: 64, 1>}, {pipeline_mode = #tpu.pipeline_mode<synchronous>, transform_indices = @transform_5, window_bounds = array<i64: 2, 64>}, {pipeline_mode = #tpu.pipeline_mode<synchronous>, transform_indices = @transform_6, window_bounds = array<i64: 2, 1>}, {transform_indices = @transform_7, window_bounds = array<i64: 2, 4>}]} {
    %c0 = arith.constant 0 : index
    %c0_0 = arith.constant 0 : index
    %0 = vector.load %arg2[%c0, %c0_0] : memref<64x12xf32, #tpu.memory_space<vmem>>, vector<64x12xf32>
    %c0_1 = arith.constant 0 : index
    %c0_2 = arith.constant 0 : index
    %1 = vector.load %arg1[%c0_1, %c0_2] : memref<12x4xf32, #tpu.memory_space<vmem>>, vector<12x4xf32>
    %cst = arith.constant dense<0.000000e+00> : vector<64x4xf32>
    %2 = tpu.matmul %0, %1, %cst {dimension_numbers = #tpu.dot_dimension_numbers<[1], [0], [0], [1], [0, 0, 1, 1], [], []>} : vector<64x12xf32>, vector<12x4xf32>, vector<64x4xf32> -> vector<64x4xf32>
    %c0_3 = arith.constant 0 : index
    %c0_4 = arith.constant 0 : index
    %3 = vector.load %arg3[%c0_3, %c0_4] : memref<64x1xf32, #tpu.memory_space<vmem>>, vector<64x1xf32>
    %4 = vector.broadcast %3 : vector<64x1xf32> to vector<64x4xf32>
    %5 = arith.addf %2, %4 : vector<64x4xf32>
    %cst_5 = arith.constant 0.000000e+00 : f32
    %6 = vector.broadcast %cst_5 : f32 to vector<64x4xf32>
    %7 = arith.maximumf %5, %6 : vector<64x4xf32>
    %c0_6 = arith.constant 0 : index
    %c0_7 = arith.constant 0 : index
    %8 = vector.load %arg4[%c0_6, %c0_7] : memref<64x64xf32, #tpu.memory_space<vmem>>, vector<64x64xf32>
    %cst_8 = arith.constant dense<0.000000e+00> : vector<64x4xf32>
    %9 = tpu.matmul %8, %7, %cst_8 {dimension_numbers = #tpu.dot_dimension_numbers<[1], [0], [0], [1], [0, 0, 1, 1], [], []>} : vector<64x64xf32>, vector<64x4xf32>, vector<64x4xf32> -> vector<64x4xf32>
    %c0_9 = arith.constant 0 : index
    %c0_10 = arith.constant 0 : index
    %10 = vector.load %arg5[%c0_9, %c0_10] : memref<64x1xf32, #tpu.memory_space<vmem>>, vector<64x1xf32>
    %11 = vector.broadcast %10 : vector<64x1xf32> to vector<64x4xf32>
    %12 = arith.addf %9, %11 : vector<64x4xf32>
    %cst_11 = arith.constant 0.000000e+00 : f32
    %13 = vector.broadcast %cst_11 : f32 to vector<64x4xf32>
    %14 = arith.maximumf %12, %13 : vector<64x4xf32>
    %c0_12 = arith.constant 0 : index
    %c0_13 = arith.constant 0 : index
    %15 = vector.load %arg6[%c0_12, %c0_13] : memref<2x64xf32, #tpu.memory_space<vmem>>, vector<2x64xf32>
    %cst_14 = arith.constant dense<0.000000e+00> : vector<2x4xf32>
    %16 = tpu.matmul %15, %14, %cst_14 {dimension_numbers = #tpu.dot_dimension_numbers<[1], [0], [0], [1], [0, 0, 1, 1], [], []>} : vector<2x64xf32>, vector<64x4xf32>, vector<2x4xf32> -> vector<2x4xf32>
    %c0_15 = arith.constant 0 : index
    %c0_16 = arith.constant 0 : index
    %17 = vector.load %arg7[%c0_15, %c0_16] : memref<2x1xf32, #tpu.memory_space<vmem>>, vector<2x1xf32>
    %18 = vector.broadcast %17 : vector<2x1xf32> to vector<2x4xf32>
    %19 = arith.addf %16, %18 : vector<2x4xf32>
    %c0_17 = arith.constant 0 : index
    %c0_18 = arith.constant 0 : index
    %20 = vector.load %arg8[%c0_17, %c0_18] : memref<2x4xf32, #tpu.memory_space<vmem>>, vector<2x4xf32>
    tpu.vector_store %arg8[%c0_17, %c0_18], %19 {strides = array<i32>} : memref<2x4xf32, #tpu.memory_space<vmem>>, vector<2x4xf32>,
    return
  }
  func.func @transform_0(%arg0: i32) -> (i32, i32) {
    %c0_i32 = arith.constant 0 : i32
    %c0_i32_0 = arith.constant 0 : i32
    return %c0_i32, %arg0 : i32, i32
  }
  func.func @transform_1(%arg0: i32) -> (i32, i32) {
    %c0_i32 = arith.constant 0 : i32
    %c0_i32_0 = arith.constant 0 : i32
    %c0_i32_1 = arith.constant 0 : i32
    return %c0_i32, %c0_i32_0 : i32, i32
  }
  func.func @transform_2(%arg0: i32) -> (i32, i32) {
    %c0_i32 = arith.constant 0 : i32
    %c0_i32_0 = arith.constant 0 : i32
    %c0_i32_1 = arith.constant 0 : i32
    return %c0_i32, %c0_i32_0 : i32, i32
  }
  func.func @transform_3(%arg0: i32) -> (i32, i32) {
    %c0_i32 = arith.constant 0 : i32
    %c0_i32_0 = arith.constant 0 : i32
    %c0_i32_1 = arith.constant 0 : i32
    return %c0_i32, %c0_i32_0 : i32, i32
  }
  func.func @transform_4(%arg0: i32) -> (i32, i32) {
    %c0_i32 = arith.constant 0 : i32
    %c0_i32_0 = arith.constant 0 : i32
    %c0_i32_1 = arith.constant 0 : i32
    return %c0_i32, %c0_i32_0 : i32, i32
  }
  func.func @transform_5(%arg0: i32) -> (i32, i32) {
    %c0_i32 = arith.constant 0 : i32
    %c0_i32_0 = arith.constant 0 : i32
    %c0_i32_1 = arith.constant 0 : i32
    return %c0_i32, %c0_i32_0 : i32, i32
  }
  func.func @transform_6(%arg0: i32) -> (i32, i32) {
    %c0_i32 = arith.constant 0 : i32
    %c0_i32_0 = arith.constant 0 : i32
    %c0_i32_1 = arith.constant 0 : i32
    return %c0_i32, %c0_i32_0 : i32, i32
  }
  func.func @transform_7(%arg0: i32) -> (i32, i32) {
    %c0_i32 = arith.constant 0 : i32
    %c0_i32_0 = arith.constant 0 : i32
    return %c0_i32, %arg0 : i32, i32
  }
}

</mosaic_0001>

<llo_original>
// kernel: tpu_custom_call.1
$region0: #{tpu_custom_call.1}
  #allocation0 [shape = 'u32[]', space=smem, size = 0x4, offset = 0x4, fixed_abs, tag = 'smem constant byte address 0x4 - core index']
  #allocation1 [shape = 'u32[144,128]{1,0:T(1,128)}', space=vmem, size = 0x12000, scoped, tag = 'internal scratch']
  %s0 = inlined_call_operand.vmem [shape: f32[12,4], index: 0, kind: input, shape index: {}]
  %s1 = inlined_call_operand.vmem [shape: f32[64,12], index: 1, kind: input, shape index: {}]
  %s2 = inlined_call_operand.vmem [shape: f32[64,1], index: 2, kind: input, shape index: {}]
  %s3 = inlined_call_operand.vmem [shape: f32[64,64], index: 3, kind: input, shape index: {}]
  %s4 = inlined_call_operand.vmem [shape: f32[64,1], index: 4, kind: input, shape index: {}]
  %s5 = inlined_call_operand.vmem [shape: f32[2,64], index: 5, kind: input, shape index: {}]
  %s6 = inlined_call_operand.vmem [shape: f32[2,1], index: 6, kind: input, shape index: {}]
  %s7 = inlined_call_operand.hbm [shape: f32[2,4], index: 7, kind: output, shape index: {}]
  %s8 = sld [smem:[#allocation0]]
  $region38: #{tpu_custom_call.1} parent=0
    _
  %s10 = ssub.s32 1, %s8
  %s11 = scalar_select 0, %s10, %s8
  $region1: #{tpu_custom_call.1} parent=0
    #allocation2 [shape = 'u8[1024]{0}', space=vmem, size = 0x400, scoped, tag = 'output window, operand 0, single buffered']
    #allocation3 [shape = 's32[1]{0}', space=sflag, size = 0x4, scoped, tag = 'scoped memory for tpu_custom_call.1']
    %12 = vsyncpa [#allocation3], 0
    // Predicated region
    $region2: #{tpu_custom_call.1} parent=1 // pred_check
      _
    $region3: #{tpu_custom_call.1} parent=1 // pred_check_branch
      %14 = sbr.rel (0) target = $region5
    $region4: #{tpu_custom_call.1} parent=1 // pred_region
      _
    $region5: #{tpu_custom_call.1} parent=1 // pred_fallthru
      _
    // Predicated region
    $region6: #{tpu_custom_call.1} parent=1 // pred_check
      _
    $region7: #{tpu_custom_call.1} parent=1 // pred_check_branch
      %16 = sbr.rel (0) target = $region9
    $region8: #{tpu_custom_call.1} parent=1 // pred_region
      _
    $region9: #{tpu_custom_call.1} parent=1 // pred_fallthru
      _
    // Predicated region
    $region10: #{tpu_custom_call.1} parent=1 // pred_check
      _
    $region11: #{tpu_custom_call.1} parent=1 // pred_check_branch
      %18 = sbr.rel (0) target = $region13
    $region12: #{tpu_custom_call.1} parent=1 // pred_region
      _
    $region13: #{tpu_custom_call.1} parent=1 // pred_fallthru
      _
    // Predicated region
    $region14: #{tpu_custom_call.1} parent=1 // pred_check
      _
    $region15: #{tpu_custom_call.1} parent=1 // pred_check_branch
      %20 = sbr.rel (0) target = $region17
    $region16: #{tpu_custom_call.1} parent=1 // pred_region
      _
    $region17: #{tpu_custom_call.1} parent=1 // pred_fallthru
      _
    // Predicated region
    $region18: #{tpu_custom_call.1} parent=1 // pred_check
      _
    $region19: #{tpu_custom_call.1} parent=1 // pred_check_branch
      %22 = sbr.rel (0) target = $region21
    $region20: #{tpu_custom_call.1} parent=1 // pred_region
      _
    $region21: #{tpu_custom_call.1} parent=1 // pred_fallthru
      _
    // Predicated region
    $region22: #{tpu_custom_call.1} parent=1 // pred_check
      _
    $region23: #{tpu_custom_call.1} parent=1 // pred_check_branch
      %24 = sbr.rel (0) target = $region25
    $region24: #{tpu_custom_call.1} parent=1 // pred_region
      _
    $region25: #{tpu_custom_call.1} parent=1 // pred_fallthru
      _
    // Predicated region
    $region26: #{tpu_custom_call.1} parent=1 // pred_check
      _
    $region27: #{tpu_custom_call.1} parent=1 // pred_check_branch
      %26 = sbr.rel (0) target = $region29
    $region28: #{tpu_custom_call.1} parent=1 // pred_region
      _
    $region29: #{tpu_custom_call.1} parent=1 // pred_fallthru
      _
    %v27 = vld [vmem:[%s1] sm:$0xff]
    %v28 = vld [vmem:[%s1 + $0x8] sm:$0xff]
    %v29 = vld [vmem:[%s1 + $0x10] sm:$0xff]
    %v30 = vld [vmem:[%s1 + $0x18] sm:$0xff]
    %v31 = vld [vmem:[%s1 + $0x20] sm:$0xff]
    %v32 = vld [vmem:[%s1 + $0x28] sm:$0xff]
    %v33 = vld [vmem:[%s1 + $0x30] sm:$0xff]
    %v34 = vld [vmem:[%s1 + $0x38] sm:$0xff]
    %v35 = vld [vmem:[%s0] sm:$0xff]
    %v36 = vld [vmem:[%s0 + $0x8] sm:$0xf]
    %v37 = vld [vmem:[%s2] sm:$0xff]
    %v38 = vld [vmem:[%s2 + $0x8] sm:$0xff]
    %v39 = vld [vmem:[%s2 + $0x10] sm:$0xff]
    %v40 = vld [vmem:[%s2 + $0x18] sm:$0xff]
    %v41 = vld [vmem:[%s2 + $0x20] sm:$0xff]
    %v42 = vld [vmem:[%s2 + $0x28] sm:$0xff]
    %v43 = vld [vmem:[%s2 + $0x30] sm:$0xff]
    %v44 = vld [vmem:[%s2 + $0x38] sm:$0xff]
    %46 = vset.pattern.permute.xlu0 0
    %47 = vperm.xlu0 %46, %v37
    %v48 = vpop.permute.xlu0 %47
    %51 = vset.pattern.permute.xlu0 0
    %52 = vperm.xlu0 %51, %v38
    %v53 = vpop.permute.xlu0 %52
    %56 = vset.pattern.permute.xlu0 0
    %57 = vperm.xlu0 %56, %v39
    %v58 = vpop.permute.xlu0 %57
    %61 = vset.pattern.permute.xlu0 0
    %62 = vperm.xlu0 %61, %v40
    %v63 = vpop.permute.xlu0 %62
    %66 = vset.pattern.permute.xlu0 0
    %67 = vperm.xlu0 %66, %v41
    %v68 = vpop.permute.xlu0 %67
    %71 = vset.pattern.permute.xlu0 0
    %72 = vperm.xlu0 %71, %v42
    %v73 = vpop.permute.xlu0 %72
    %76 = vset.pattern.permute.xlu0 0
    %77 = vperm.xlu0 %76, %v43
    %v78 = vpop.permute.xlu0 %77
    %81 = vset.pattern.permute.xlu0 0
    %82 = vperm.xlu0 %81, %v44
    %v83 = vpop.permute.xlu0 %82
    %vm85 = vcmask 97280
    %v87 = vsel %vm85, %v27, 0
    %v90 = vsel %vm85, %v28, 0
    %v93 = vsel %vm85, %v29, 0
    %v96 = vsel %vm85, %v30, 0
    %v99 = vsel %vm85, %v31, 0
    %v102 = vsel %vm85, %v32, 0
    %v105 = vsel %vm85, %v33, 0
    %v108 = vsel %vm85, %v34, 0
    %vm110 = vcmask 1043456
    %v112 = vsel %vm110, %v36, 0
    %114 = vmatprep.subr.mxu0 0.0
    %115 = vmatpush1.msra.mxu0 0.0
    %116 = vmatprep.subr.mxu0 0.0
    %117 = vmatpush1.msra.mxu0 0.0
    %118 = vmatprep.subr.mxu0 0.0
    %119 = vmatpush1.msra.mxu0 0.0
    %120 = vmatprep.subr.mxu0 0.0
    %121 = vmatpush1.msra.mxu0 0.0
    %122 = vmatprep.subr.mxu0 0.0
    %123 = vmatpush1.msra.mxu0 0.0
    %124 = vmatprep.subr.mxu0 0.0
    %125 = vmatpush1.msra.mxu0 0.0
    %126 = vmatprep.subr.mxu0 0.0
    %127 = vmatpush1.msra.mxu0 0.0
    %128 = vmatprep.subr.mxu0 0.0
    %129 = vmatpush1.msra.mxu0 0.0
    %130 = vmatprep.subr.mxu0 0.0
    %131 = vmatpush1.msra.mxu0 0.0
    %132 = vmatprep.subr.mxu0 0.0
    %133 = vmatpush1.msra.mxu0 0.0
    %134 = vmatprep.subr.mxu0 0.0
    %135 = vmatpush1.msra.mxu0 0.0
    %136 = vmatprep.subr.mxu0 0.0
    %137 = vmatpush1.msra.mxu0 0.0
    %138 = vmatprep.subr.mxu0 0.0
    %139 = vmatpush1.msra.mxu0 0.0
    %140 = vmatprep.subr.mxu0 0.0
    %141 = vmatpush1.msra.mxu0 0.0
    %142 = vmatprep.subr.mxu0 0.0
    %143 = vmatpush1.msra.mxu0 %v112
    %144 = vmatprep.subr.mxu0 0.0
    %145 = vmatpush1.msra.mxu0 %v35
    %146 = vmatprep.subr.mxu0 0.0
    %147 = vmatpush2.msra.mxu0 0.0
    %148 = vmatprep.subr.mxu0 0.0
    %149 = vmatpush2.msra.mxu0 0.0
    %150 = vmatprep.subr.mxu0 0.0
    %151 = vmatpush2.msra.mxu0 0.0
    %152 = vmatprep.subr.mxu0 0.0
    %153 = vmatpush2.msra.mxu0 0.0
    %154 = vmatprep.subr.mxu0 0.0
    %155 = vmatpush2.msra.mxu0 0.0
    %156 = vmatprep.subr.mxu0 0.0
    %157 = vmatpush2.msra.mxu0 0.0
    %158 = vmatprep.subr.mxu0 0.0
    %159 = vmatpush2.msra.mxu0 0.0
    %160 = vmatprep.subr.mxu0 0.0
    %161 = vmatpush2.msra.mxu0 0.0
    %162 = vmatprep.subr.mxu0 0.0
    %163 = vmatpush2.msra.mxu0 0.0
    %164 = vmatprep.subr.mxu0 0.0
    %165 = vmatpush2.msra.mxu0 0.0
    %166 = vmatprep.subr.mxu0 0.0
    %167 = vmatpush2.msra.mxu0 0.0
    %168 = vmatprep.subr.mxu0 0.0
    %169 = vmatpush2.msra.mxu0 0.0
    %170 = vmatprep.subr.mxu0 0.0
    %171 = vmatpush2.msra.mxu0 0.0
    %172 = vmatprep.subr.mxu0 0.0
    %173 = vmatpush2.msra.mxu0 0.0
    %174 = vmatprep.subr.mxu0 0.0
    %175 = vmatpush2.msra.mxu0 0.0
    %176 = vmatprep.subr.mxu0 0.0
    %177 = vmatpush2.msra.mxu0 0.0
    %178 = vmatprep.mubr.f32.mxu0 0.0
    %179 = vmatmul.mubr.f32.gmra.mxu0 %v87
    %v180 = vpop.f32.mrf.mxu0
    %v181 = vadd.f32 %v48, %v180
    %v182 = vpop.f32.mrf.mxu0
    %183 = vmatprep.mubr.f32.mxu0 0.0
    %184 = vmatmul.mubr.f32.gmra.mxu0 %v90
    %v185 = vpop.f32.mrf.mxu0
    %v186 = vadd.f32 %v53, %v185
    %v187 = vpop.f32.mrf.mxu0
    %188 = vmatprep.mubr.f32.mxu0 0.0
    %189 = vmatmul.mubr.f32.gmra.mxu0 %v93
    %v190 = vpop.f32.mrf.mxu0
    %v191 = vadd.f32 %v58, %v190
    %v192 = vpop.f32.mrf.mxu0
    %193 = vmatprep.mubr.f32.mxu0 0.0
    %194 = vmatmul.mubr.f32.gmra.mxu0 %v96
    %v195 = vpop.f32.mrf.mxu0
    %v196 = vadd.f32 %v63, %v195
    %v197 = vpop.f32.mrf.mxu0
    %198 = vmatprep.mubr.f32.mxu0 0.0
    %199 = vmatmul.mubr.f32.gmra.mxu0 %v99
    %v200 = vpop.f32.mrf.mxu0
    %v201 = vadd.f32 %v68, %v200
    %v202 = vpop.f32.mrf.mxu0
    %203 = vmatprep.mubr.f32.mxu0 0.0
    %204 = vmatmul.mubr.f32.gmra.mxu0 %v102
    %v205 = vpop.f32.mrf.mxu0
    %v206 = vadd.f32 %v73, %v205
    %v207 = vpop.f32.mrf.mxu0
    %208 = vmatprep.mubr.f32.mxu0 0.0
    %209 = vmatmul.mubr.f32.gmra.mxu0 %v105
    %v210 = vpop.f32.mrf.mxu0
    %v211 = vadd.f32 %v78, %v210
    %v212 = vpop.f32.mrf.mxu0
    %213 = vmatprep.mubr.f32.mxu0 0.0
    %214 = vmatmul.mubr.f32.gmra.mxu0 %v108
    %v215 = vpop.f32.mrf.mxu0
    %v216 = vadd.f32 %v83, %v215
    %v217 = vpop.f32.mrf.mxu0
    %218 = vdwg.mxu0
    %v219 = vmax.f32 %v181, 0.0
    %v220 = vmax.f32 %v186, 0.0
    %v221 = vmax.f32 %v191, 0.0
    %v222 = vmax.f32 %v196, 0.0
    %v223 = vmax.f32 %v201, 0.0
    %v224 = vmax.f32 %v206, 0.0
    %v225 = vmax.f32 %v211, 0.0
    %v226 = vmax.f32 %v216, 0.0
    %v227 = vld [vmem:[%s3] sm:$0xff]
    %v228 = vld [vmem:[%s3 + $0x8] sm:$0xff]
    %v229 = vld [vmem:[%s3 + $0x10] sm:$0xff]
    %v230 = vld [vmem:[%s3 + $0x18] sm:$0xff]
    %v231 = vld [vmem:[%s3 + $0x20] sm:$0xff]
    %v232 = vld [vmem:[%s3 + $0x28] sm:$0xff]
    %v233 = vld [vmem:[%s3 + $0x30] sm:$0xff]
    %v234 = vld [vmem:[%s3 + $0x38] sm:$0xff]
    %v235 = vld [vmem:[%s4] sm:$0xff]
    %v236 = vld [vmem:[%s4 + $0x8] sm:$0xff]
    %v237 = vld [vmem:[%s4 + $0x10] sm:$0xff]
    %v238 = vld [vmem:[%s4 + $0x18] sm:$0xff]
    %v239 = vld [vmem:[%s4 + $0x20] sm:$0xff]
    %v240 = vld [vmem:[%s4 + $0x28] sm:$0xff]
    %v241 = vld [vmem:[%s4 + $0x30] sm:$0xff]
    %v242 = vld [vmem:[%s4 + $0x38] sm:$0xff]
    %244 = vset.pattern.permute.xlu0 0
    %245 = vperm.xlu0 %244, %v235
    %v246 = vpop.permute.xlu0 %245
    %249 = vset.pattern.permute.xlu0 0
    %250 = vperm.xlu0 %249, %v236
    %v251 = vpop.permute.xlu0 %250
    %254 = vset.pattern.permute.xlu0 0
    %255 = vperm.xlu0 %254, %v237
    %v256 = vpop.permute.xlu0 %255
    %259 = vset.pattern.permute.xlu0 0
    %260 = vperm.xlu0 %259, %v238
    %v261 = vpop.permute.xlu0 %260
    %264 = vset.pattern.permute.xlu0 0
    %265 = vperm.xlu0 %264, %v239
    %v266 = vpop.permute.xlu0 %265
    %269 = vset.pattern.permute.xlu0 0
    %270 = vperm.xlu0 %269, %v240
    %v271 = vpop.permute.xlu0 %270
    %274 = vset.pattern.permute.xlu0 0
    %275 = vperm.xlu0 %274, %v241
    %v276 = vpop.permute.xlu0 %275
    %279 = vset.pattern.permute.xlu0 0
    %280 = vperm.xlu0 %279, %v242
    %v281 = vpop.permute.xlu0 %280
    %vm283 = vcmask 523264
    %v285 = vsel %vm283, %v227, 0
    %v288 = vsel %vm283, %v228, 0
    %v291 = vsel %vm283, %v229, 0
    %v294 = vsel %vm283, %v230, 0
    %v297 = vsel %vm283, %v231, 0
    %v300 = vsel %vm283, %v232, 0
    %v303 = vsel %vm283, %v233, 0
    %v306 = vsel %vm283, %v234, 0
    %308 = vmatprep.subr.mxu0 0.0
    %309 = vmatpush1.msra.mxu0 0.0
    %310 = vmatprep.subr.mxu0 0.0
    %311 = vmatpush1.msra.mxu0 0.0
    %312 = vmatprep.subr.mxu0 0.0
    %313 = vmatpush1.msra.mxu0 0.0
    %314 = vmatprep.subr.mxu0 0.0
    %315 = vmatpush1.msra.mxu0 0.0
    %316 = vmatprep.subr.mxu0 0.0
    %317 = vmatpush1.msra.mxu0 0.0
    %318 = vmatprep.subr.mxu0 0.0
    %319 = vmatpush1.msra.mxu0 0.0
    %320 = vmatprep.subr.mxu0 0.0
    %321 = vmatpush1.msra.mxu0 0.0
    %322 = vmatprep.subr.mxu0 0.0
    %323 = vmatpush1.msra.mxu0 0.0
    %324 = vmatprep.subr.mxu0 0.0
    %325 = vmatpush1.msra.mxu0 %v226
    %326 = vmatprep.subr.mxu0 0.0
    %327 = vmatpush1.msra.mxu0 %v225
    %328 = vmatprep.subr.mxu0 0.0
    %329 = vmatpush1.msra.mxu0 %v224
    %330 = vmatprep.subr.mxu0 0.0
    %331 = vmatpush1.msra.mxu0 %v223
    %332 = vmatprep.subr.mxu0 0.0
    %333 = vmatpush1.msra.mxu0 %v222
    %334 = vmatprep.subr.mxu0 0.0
    %335 = vmatpush1.msra.mxu0 %v221
    %336 = vmatprep.subr.mxu0 0.0
    %337 = vmatpush1.msra.mxu0 %v220
    %338 = vmatprep.subr.mxu0 0.0
    %339 = vmatpush1.msra.mxu0 %v219
    %340 = vmatprep.subr.mxu0 0.0
    %341 = vmatpush2.msra.mxu0 0.0
    %342 = vmatprep.subr.mxu0 0.0
    %343 = vmatpush2.msra.mxu0 0.0
    %344 = vmatprep.subr.mxu0 0.0
    %345 = vmatpush2.msra.mxu0 0.0
    %346 = vmatprep.subr.mxu0 0.0
    %347 = vmatpush2.msra.mxu0 0.0
    %348 = vmatprep.subr.mxu0 0.0
    %349 = vmatpush2.msra.mxu0 0.0
    %350 = vmatprep.subr.mxu0 0.0
    %351 = vmatpush2.msra.mxu0 0.0
    %352 = vmatprep.subr.mxu0 0.0
    %353 = vmatpush2.msra.mxu0 0.0
    %354 = vmatprep.subr.mxu0 0.0
    %355 = vmatpush2.msra.mxu0 0.0
    %356 = vmatprep.subr.mxu0 0.0
    %357 = vmatpush2.msra.mxu0 0.0
    %358 = vmatprep.subr.mxu0 0.0
    %359 = vmatpush2.msra.mxu0 0.0
    %360 = vmatprep.subr.mxu0 0.0
    %361 = vmatpush2.msra.mxu0 0.0
    %362 = vmatprep.subr.mxu0 0.0
    %363 = vmatpush2.msra.mxu0 0.0
    %364 = vmatprep.subr.mxu0 0.0
    %365 = vmatpush2.msra.mxu0 0.0
    %366 = vmatprep.subr.mxu0 0.0
    %367 = vmatpush2.msra.mxu0 0.0
    %368 = vmatprep.subr.mxu0 0.0
    %369 = vmatpush2.msra.mxu0 0.0
    %370 = vmatprep.subr.mxu0 0.0
    %371 = vmatpush2.msra.mxu0 0.0
    %372 = vmatprep.mubr.f32.mxu0 0.0
    %373 = vmatmul.mubr.f32.gmra.mxu0 %v285
    %v374 = vpop.f32.mrf.mxu0
    %v375 = vadd.f32 %v246, %v374
    %v376 = vpop.f32.mrf.mxu0
    %377 = vmatprep.mubr.f32.mxu0 0.0
    %378 = vmatmul.mubr.f32.gmra.mxu0 %v288
    %v379 = vpop.f32.mrf.mxu0
    %v380 = vadd.f32 %v251, %v379
    %v381 = vpop.f32.mrf.mxu0
    %382 = vmatprep.mubr.f32.mxu0 0.0
    %383 = vmatmul.mubr.f32.gmra.mxu0 %v291
    %v384 = vpop.f32.mrf.mxu0
    %v385 = vadd.f32 %v256, %v384
    %v386 = vpop.f32.mrf.mxu0
    %387 = vmatprep.mubr.f32.mxu0 0.0
    %388 = vmatmul.mubr.f32.gmra.mxu0 %v294
    %v389 = vpop.f32.mrf.mxu0
    %v390 = vadd.f32 %v261, %v389
    %v391 = vpop.f32.mrf.mxu0
    %392 = vmatprep.mubr.f32.mxu0 0.0
    %393 = vmatmul.mubr.f32.gmra.mxu0 %v297
    %v394 = vpop.f32.mrf.mxu0
    %v395 = vadd.f32 %v266, %v394
    %v396 = vpop.f32.mrf.mxu0
    %397 = vmatprep.mubr.f32.mxu0 0.0
    %398 = vmatmul.mubr.f32.gmra.mxu0 %v300
    %v399 = vpop.f32.mrf.mxu0
    %v400 = vadd.f32 %v271, %v399
    %v401 = vpop.f32.mrf.mxu0
    %402 = vmatprep.mubr.f32.mxu0 0.0
    %403 = vmatmul.mubr.f32.gmra.mxu0 %v303
    %v404 = vpop.f32.mrf.mxu0
    %v405 = vadd.f32 %v276, %v404
    %v406 = vpop.f32.mrf.mxu0
    %407 = vmatprep.mubr.f32.mxu0 0.0
    %408 = vmatmul.mubr.f32.gmra.mxu0 %v306
    %v409 = vpop.f32.mrf.mxu0
    %v410 = vadd.f32 %v281, %v409
    %v411 = vpop.f32.mrf.mxu0
    %412 = vdwg.mxu0
    %v413 = vmax.f32 %v375, 0.0
    %v414 = vmax.f32 %v380, 0.0
    %v415 = vmax.f32 %v385, 0.0
    %v416 = vmax.f32 %v390, 0.0
    %v417 = vmax.f32 %v395, 0.0
    %v418 = vmax.f32 %v400, 0.0
    %v419 = vmax.f32 %v405, 0.0
    %v420 = vmax.f32 %v410, 0.0
    %v421 = vld [vmem:[%s5] sm:$0x3]
    %v422 = vld [vmem:[%s6] sm:$0x3]
    %424 = vset.pattern.permute.xlu0 0
    %425 = vperm.xlu0 %424, %v422
    %v426 = vpop.permute.xlu0 %425
    %v429 = vsel %vm283, %v421, 0
    %431 = vmatprep.subr.mxu0 0.0
    %432 = vmatpush1.msra.mxu0 0.0
    %433 = vmatprep.subr.mxu0 0.0
    %434 = vmatpush1.msra.mxu0 0.0
    %435 = vmatprep.subr.mxu0 0.0
    %436 = vmatpush1.msra.mxu0 0.0
    %437 = vmatprep.subr.mxu0 0.0
    %438 = vmatpush1.msra.mxu0 0.0
    %439 = vmatprep.subr.mxu0 0.0
    %440 = vmatpush1.msra.mxu0 0.0
    %441 = vmatprep.subr.mxu0 0.0
    %442 = vmatpush1.msra.mxu0 0.0
    %443 = vmatprep.subr.mxu0 0.0
    %444 = vmatpush1.msra.mxu0 0.0
    %445 = vmatprep.subr.mxu0 0.0
    %446 = vmatpush1.msra.mxu0 0.0
    %447 = vmatprep.subr.mxu0 0.0
    %448 = vmatpush1.msra.mxu0 %v420
    %449 = vmatprep.subr.mxu0 0.0
    %450 = vmatpush1.msra.mxu0 %v419
    %451 = vmatprep.subr.mxu0 0.0
    %452 = vmatpush1.msra.mxu0 %v418
    %453 = vmatprep.subr.mxu0 0.0
    %454 = vmatpush1.msra.mxu0 %v417
    %455 = vmatprep.subr.mxu0 0.0
    %456 = vmatpush1.msra.mxu0 %v416
    %457 = vmatprep.subr.mxu0 0.0
    %458 = vmatpush1.msra.mxu0 %v415
    %459 = vmatprep.subr.mxu0 0.0
    %460 = vmatpush1.msra.mxu0 %v414
    %461 = vmatprep.subr.mxu0 0.0
    %462 = vmatpush1.msra.mxu0 %v413
    %463 = vmatprep.subr.mxu0 0.0
    %464 = vmatpush2.msra.mxu0 0.0
    %465 = vmatprep.subr.mxu0 0.0
    %466 = vmatpush2.msra.mxu0 0.0
    %467 = vmatprep.subr.mxu0 0.0
    %468 = vmatpush2.msra.mxu0 0.0
    %469 = vmatprep.subr.mxu0 0.0
    %470 = vmatpush2.msra.mxu0 0.0
    %471 = vmatprep.subr.mxu0 0.0
    %472 = vmatpush2.msra.mxu0 0.0
    %473 = vmatprep.subr.mxu0 0.0
    %474 = vmatpush2.msra.mxu0 0.0
    %475 = vmatprep.subr.mxu0 0.0
    %476 = vmatpush2.msra.mxu0 0.0
    %477 = vmatprep.subr.mxu0 0.0
    %478 = vmatpush2.msra.mxu0 0.0
    %479 = vmatprep.subr.mxu0 0.0
    %480 = vmatpush2.msra.mxu0 0.0
    %481 = vmatprep.subr.mxu0 0.0
    %482 = vmatpush2.msra.mxu0 0.0
    %483 = vmatprep.subr.mxu0 0.0
    %484 = vmatpush2.msra.mxu0 0.0
    %485 = vmatprep.subr.mxu0 0.0
    %486 = vmatpush2.msra.mxu0 0.0
    %487 = vmatprep.subr.mxu0 0.0
    %488 = vmatpush2.msra.mxu0 0.0
    %489 = vmatprep.subr.mxu0 0.0
    %490 = vmatpush2.msra.mxu0 0.0
    %491 = vmatprep.subr.mxu0 0.0
    %492 = vmatpush2.msra.mxu0 0.0
    %493 = vmatprep.subr.mxu0 0.0
    %494 = vmatpush2.msra.mxu0 0.0
    %495 = vmatprep.mubr.f32.mxu0 0.0
    %496 = vmatmul.mubr.f32.gmra.mxu0 %v429
    %v497 = vpop.f32.mrf.mxu0
    %v498 = vadd.f32 %v426, %v497
    %v499 = vpop.f32.mrf.mxu0
    %500 = vdwg.mxu0
    %vm501 = vcmask 25600
    %502 = vst.msk [vmem:[#allocation2] sm:$0x3] %vm501, %v498
    // Predicated region
    $region30: #{tpu_custom_call.1} parent=1 // pred_check
      _
    $region31: #{tpu_custom_call.1} parent=1 // pred_check_branch
      %504 = sbr.rel (0) target = $region33
    $region32: #{tpu_custom_call.1} parent=1 // pred_region
      %s506 = ssub.s32 32, 32
      %507 = vsyncadd [#allocation3], %s506
      %s509 = sshll.u32 [#allocation2], 4
      %s510 = int_to_ptr.vmem [resolvable:$true] %s509
      %512 = dma.vmem_to_hbm [thread:$0]  %s510, 32, %s7, [#allocation3]
    $region33: #{tpu_custom_call.1} parent=1 // pred_fallthru
      _
    // Predicated region
    $region34: #{tpu_custom_call.1} parent=1 // pred_check
      _
    $region35: #{tpu_custom_call.1} parent=1 // pred_check_branch
      %514 = sbr.rel (0) target = $region37
    $region36: #{tpu_custom_call.1} parent=1 // pred_region
      %515 = dma.done [#allocation3], 32
    $region37: #{tpu_custom_call.1} parent=1 // pred_fallthru
      _
    %516 = vsyncpa [#allocation3], 1

</llo_original>
